<compile_context>
chip_gen: v7x
topology: tpu7x:2x2x1
jax: 0.10.0
libtpu: 0.0.40
codegen_flags: <defaults>
</compile_context>

<pallas_src>
import jax
import jax.numpy as jnp
from jax.experimental import pallas as pl
from jax.experimental.pallas import tpu as pltpu

# Small, TPU-tile-friendly stand-ins for TOTAL_VECTOR_SIZE / TOTAL_ACTIONS.
INPUT_SIZE = 256      # TOTAL_VECTOR_SIZE
HIDDEN1 = 512
HIDDEN2 = 256
OUTPUT_SIZE = 128     # TOTAL_ACTIONS

# Upper bound on rows per grid step. 1024 rows => ~1.5 MB of x/out HBM traffic per
# step, so the fixed ~0.35us per-step overhead is well amortized, while the full
# per-step VMEM footprint (x, h1, h2, out, bf16 weights, double buffers) stays
# under ~10 MB -- comfortably inside even v7x's 64 MiB VMEM.
MAX_BATCH_TILE = 1024


def _mlp_kernel(x_ref, w1_ref, b1_ref, w2_ref, b2_ref, w3_ref, b3_ref, out_ref):
    # Cast activations to bf16 in-kernel (VPU) so MXU operands are bf16 on all of
    # v5e/v6e/v7x; accumulate in f32; do bias + ReLU epilogue in f32.
    x = x_ref[...].astype(jnp.bfloat16)
    # fc1 + bias + ReLU
    h1 = jnp.dot(x, w1_ref[...], preferred_element_type=jnp.float32)
    h1 = jnp.maximum(h1 + b1_ref[...], 0.0)
    # (dropout: identity in eval mode)
    # fc2 + bias + ReLU
    h2 = jnp.dot(h1.astype(jnp.bfloat16), w2_ref[...],
                 preferred_element_type=jnp.float32)
    h2 = jnp.maximum(h2 + b2_ref[...], 0.0)
    # (dropout: identity in eval mode)
    # fc3 (logits, no activation)
    out = jnp.dot(h2.astype(jnp.bfloat16), w3_ref[...],
                  preferred_element_type=jnp.float32)
    out_ref[...] = (out + b3_ref[...]).astype(out_ref.dtype)


def catan_mlp_forward(x, params):
    """x: (B, INPUT_SIZE) float32. Returns (B, OUTPUT_SIZE) float32 action scores."""
    w1, b1, w2, b2, w3, b3 = params
    x = x.astype(jnp.float32)
    B = x.shape[0]

    # Adaptive batch tiling:
    #   * B (rounded up to a multiple of 8 sublanes) <= MAX_BATCH_TILE -> one grid
    #     step sized exactly to the rounded batch (no 256/1024-row pad waste).
    #   * larger B -> MAX_BATCH_TILE-row tiles, batch padded up to a tile multiple.
    b8 = ((B + 7) // 8) * 8
    tile = b8 if b8 <= MAX_BATCH_TILE else MAX_BATCH_TILE
    num_tiles = pl.cdiv(B, tile)
    Bp = num_tiles * tile
    if Bp != B:
        x = jnp.pad(x, ((0, Bp - B), (0, 0)))

    # Grid-invariant weight/bias blocks: constant index_map -> fetched once, resident.
    full = lambda shape: pl.BlockSpec(shape, lambda i: (0, 0))

    flops = 2 * Bp * (INPUT_SIZE * HIDDEN1 + HIDDEN1 * HIDDEN2 + HIDDEN2 * OUTPUT_SIZE)
    bytes_accessed = (
        Bp * INPUT_SIZE * 4                                                        # x (f32)
        + (INPUT_SIZE * HIDDEN1 + HIDDEN1 * HIDDEN2 + HIDDEN2 * OUTPUT_SIZE) * 2   # weights (bf16)
        + (HIDDEN1 + HIDDEN2 + OUTPUT_SIZE) * 4                                    # biases (f32)
        + Bp * OUTPUT_SIZE * 4                                                     # out (f32)
    )

    out = pl.pallas_call(
        _mlp_kernel,
        out_shape=jax.ShapeDtypeStruct((Bp, OUTPUT_SIZE), jnp.float32),
        grid_spec=pltpu.PrefetchScalarGridSpec(
            num_scalar_prefetch=0,
            grid=(num_tiles,),
            in_specs=[
                pl.BlockSpec((tile, INPUT_SIZE), lambda i: (i, 0)),  # x tile (f32)
                full((INPUT_SIZE, HIDDEN1)),    # w1 (bf16)
                full((1, HIDDEN1)),             # b1 (f32)
                full((HIDDEN1, HIDDEN2)),       # w2 (bf16)
                full((1, HIDDEN2)),             # b2 (f32)
                full((HIDDEN2, OUTPUT_SIZE)),   # w3 (bf16)
                full((1, OUTPUT_SIZE)),         # b3 (f32)
            ],
            out_specs=pl.BlockSpec((tile, OUTPUT_SIZE), lambda i: (i, 0)),
        ),
        compiler_params=pltpu.CompilerParams(
            # batch tiles are independent -> split across TCs on v7x megacore
            dimension_semantics=("parallel",),
        ),
        cost_estimate=pl.CostEstimate(
            flops=flops, transcendentals=0, bytes_accessed=bytes_accessed),
    )(x, w1, b1, w2, b2, w3, b3)

    return out[:B]


def init_params(key):
    """Deterministic init mimicking nn.Linear: U(-1/sqrt(fan_in), 1/sqrt(fan_in)).
    Weights are stored as (in_features, out_features) in bf16 (MXU operand dtype,
    halves weight HBM traffic); biases stay f32 for the f32 epilogue."""
    def linear(key, fan_in, fan_out):
        kw, kb = jax.random.split(key)
        bound = 1.0 / jnp.sqrt(fan_in)
        w = jax.random.uniform(kw, (fan_in, fan_out), jnp.float32, -bound, bound)
        b = jax.random.uniform(kb, (1, fan_out), jnp.float32, -bound, bound)
        return w.astype(jnp.bfloat16), b

    k1, k2, k3 = jax.random.split(key, 3)
    w1, b1 = linear(k1, INPUT_SIZE, HIDDEN1)
    w2, b2 = linear(k2, HIDDEN1, HIDDEN2)
    w3, b3 = linear(k3, HIDDEN2, OUTPUT_SIZE)
    return (w1, b1, w2, b2, w3, b3)


def reference_forward(x, params):
    """Pure-JAX reference mirroring the kernel's bf16-operand / f32-accumulate math."""
    w1, b1, w2, b2, w3, b3 = params
    h1 = jnp.dot(x.astype(jnp.bfloat16), w1, preferred_element_type=jnp.float32)
    h1 = jnp.maximum(h1 + b1, 0.0)
    h2 = jnp.dot(h1.astype(jnp.bfloat16), w2, preferred_element_type=jnp.float32)
    h2 = jnp.maximum(h2 + b2, 0.0)
    out = jnp.dot(h2.astype(jnp.bfloat16), w3, preferred_element_type=jnp.float32)
    return out + b3


if __name__ == "__main__":
    key = jax.random.PRNGKey(0)
    kp, kx = jax.random.split(key)
    params = init_params(kp)

    B = 8  # small demo batch -> single 8-row grid step (no padding waste)
    x = jax.random.normal(kx, (B, INPUT_SIZE), jnp.float32)

    out = catan_mlp_forward(x, params)
    out = jax.block_until_ready(out)

    ref = reference_forward(x, params)
    assert out.shape == (B, OUTPUT_SIZE)
    # bf16 MXU operands -> tolerance vs. the (matching) bf16 reference reflects the
    # intentional mixed-precision tradeoff, not a bug.
    assert jnp.allclose(out, ref, atol=1e-2, rtol=1e-2)

    print("KERNEL_OK")
</pallas_src>

<mosaic_0001>
module attributes {stable_mosaic.version = 11 : i64} {
  func.func @_mlp_kernel(%arg0: i32, %arg1: memref<8x256xf32, #tpu.memory_space<vmem>>, %arg2: memref<256x512xbf16, #tpu.memory_space<vmem>>, %arg3: memref<1x512xf32, #tpu.memory_space<vmem>>, %arg4: memref<512x256xbf16, #tpu.memory_space<vmem>>, %arg5: memref<1x256xf32, #tpu.memory_space<vmem>>, %arg6: memref<256x128xbf16, #tpu.memory_space<vmem>>, %arg7: memref<1x128xf32, #tpu.memory_space<vmem>>, %arg8: memref<8x128xf32, #tpu.memory_space<vmem>>) attributes {dimension_semantics = [#tpu.dimension_semantics<parallel>], iteration_bounds = array<i64: 1>, scalar_prefetch = 0 : i64, scratch_operands = 0 : i64, tpu.core_type = #tpu.core_type<tc>, window_params = [{transform_indices = @transform_0, window_bounds = array<i64: 8, 256>}, {pipeline_mode = #tpu.pipeline_mode<synchronous>, transform_indices = @transform_1, window_bounds = array<i64: 256, 512>}, {pipeline_mode = #tpu.pipeline_mode<synchronous>, transform_indices = @transform_2, window_bounds = array<i64: 1, 512>}, {pipeline_mode = #tpu.pipeline_mode<synchronous>, transform_indices = @transform_3, window_bounds = array<i64: 512, 256>}, {pipeline_mode = #tpu.pipeline_mode<synchronous>, transform_indices = @transform_4, window_bounds = array<i64: 1, 256>}, {pipeline_mode = #tpu.pipeline_mode<synchronous>, transform_indices = @transform_5, window_bounds = array<i64: 256, 128>}, {pipeline_mode = #tpu.pipeline_mode<synchronous>, transform_indices = @transform_6, window_bounds = array<i64: 1, 128>}, {transform_indices = @transform_7, window_bounds = array<i64: 8, 128>}]} {
    %c0 = arith.constant 0 : index
    %c0_0 = arith.constant 0 : index
    %0 = vector.load %arg1[%c0, %c0_0] : memref<8x256xf32, #tpu.memory_space<vmem>>, vector<8x256xf32>
    %1 = arith.truncf %0 : vector<8x256xf32> to vector<8x256xbf16>
    %c0_1 = arith.constant 0 : index
    %c0_2 = arith.constant 0 : index
    %2 = vector.load %arg2[%c0_1, %c0_2] : memref<256x512xbf16, #tpu.memory_space<vmem>>, vector<256x512xbf16>
    %cst = arith.constant dense<0.000000e+00> : vector<8x512xf32>
    %3 = tpu.matmul %1, %2, %cst {dimension_numbers = #tpu.dot_dimension_numbers<[1], [0], [0], [1], [0, 0, 1, 1], [], []>} : vector<8x256xbf16>, vector<256x512xbf16>, vector<8x512xf32> -> vector<8x512xf32>
    %c0_3 = arith.constant 0 : index
    %c0_4 = arith.constant 0 : index
    %4 = vector.load %arg3[%c0_3, %c0_4] : memref<1x512xf32, #tpu.memory_space<vmem>>, vector<1x512xf32>
    %5 = vector.broadcast %4 : vector<1x512xf32> to vector<8x512xf32>
    %6 = arith.addf %3, %5 : vector<8x512xf32>
    %cst_5 = arith.constant 0.000000e+00 : f32
    %7 = vector.broadcast %cst_5 : f32 to vector<8x512xf32>
    %8 = arith.maximumf %6, %7 : vector<8x512xf32>
    %9 = arith.truncf %8 : vector<8x512xf32> to vector<8x512xbf16>
    %c0_6 = arith.constant 0 : index
    %c0_7 = arith.constant 0 : index
    %10 = vector.load %arg4[%c0_6, %c0_7] : memref<512x256xbf16, #tpu.memory_space<vmem>>, vector<512x256xbf16>
    %cst_8 = arith.constant dense<0.000000e+00> : vector<8x256xf32>
    %11 = tpu.matmul %9, %10, %cst_8 {dimension_numbers = #tpu.dot_dimension_numbers<[1], [0], [0], [1], [0, 0, 1, 1], [], []>} : vector<8x512xbf16>, vector<512x256xbf16>, vector<8x256xf32> -> vector<8x256xf32>
    %c0_9 = arith.constant 0 : index
    %c0_10 = arith.constant 0 : index
    %12 = vector.load %arg5[%c0_9, %c0_10] : memref<1x256xf32, #tpu.memory_space<vmem>>, vector<1x256xf32>
    %13 = vector.broadcast %12 : vector<1x256xf32> to vector<8x256xf32>
    %14 = arith.addf %11, %13 : vector<8x256xf32>
    %cst_11 = arith.constant 0.000000e+00 : f32
    %15 = vector.broadcast %cst_11 : f32 to vector<8x256xf32>
    %16 = arith.maximumf %14, %15 : vector<8x256xf32>
    %17 = arith.truncf %16 : vector<8x256xf32> to vector<8x256xbf16>
    %c0_12 = arith.constant 0 : index
    %c0_13 = arith.constant 0 : index
    %18 = vector.load %arg6[%c0_12, %c0_13] : memref<256x128xbf16, #tpu.memory_space<vmem>>, vector<256x128xbf16>
    %cst_14 = arith.constant dense<0.000000e+00> : vector<8x128xf32>
    %19 = tpu.matmul %17, %18, %cst_14 {dimension_numbers = #tpu.dot_dimension_numbers<[1], [0], [0], [1], [0, 0, 1, 1], [], []>} : vector<8x256xbf16>, vector<256x128xbf16>, vector<8x128xf32> -> vector<8x128xf32>
    %c0_15 = arith.constant 0 : index
    %c0_16 = arith.constant 0 : index
    %20 = vector.load %arg7[%c0_15, %c0_16] : memref<1x128xf32, #tpu.memory_space<vmem>>, vector<1x128xf32>
    %21 = vector.broadcast %20 : vector<1x128xf32> to vector<8x128xf32>
    %22 = arith.addf %19, %21 : vector<8x128xf32>
    %c0_17 = arith.constant 0 : index
    %c0_18 = arith.constant 0 : index
    %23 = vector.load %arg8[%c0_17, %c0_18] : memref<8x128xf32, #tpu.memory_space<vmem>>, vector<8x128xf32>
    tpu.vector_store %arg8[%c0_17, %c0_18], %22 {strides = array<i32>} : memref<8x128xf32, #tpu.memory_space<vmem>>, vector<8x128xf32>,
    return
  }
  func.func @transform_0(%arg0: i32) -> (i32, i32) {
    %c0_i32 = arith.constant 0 : i32
    %c0_i32_0 = arith.constant 0 : i32
    return %arg0, %c0_i32 : i32, i32
  }
  func.func @transform_1(%arg0: i32) -> (i32, i32) {
    %c0_i32 = arith.constant 0 : i32
    %c0_i32_0 = arith.constant 0 : i32
    %c0_i32_1 = arith.constant 0 : i32
    return %c0_i32, %c0_i32_0 : i32, i32
  }
  func.func @transform_2(%arg0: i32) -> (i32, i32) {
    %c0_i32 = arith.constant 0 : i32
    %c0_i32_0 = arith.constant 0 : i32
    %c0_i32_1 = arith.constant 0 : i32
    return %c0_i32, %c0_i32_0 : i32, i32
  }
  func.func @transform_3(%arg0: i32) -> (i32, i32) {
    %c0_i32 = arith.constant 0 : i32
    %c0_i32_0 = arith.constant 0 : i32
    %c0_i32_1 = arith.constant 0 : i32
    return %c0_i32, %c0_i32_0 : i32, i32
  }
  func.func @transform_4(%arg0: i32) -> (i32, i32) {
    %c0_i32 = arith.constant 0 : i32
    %c0_i32_0 = arith.constant 0 : i32
    %c0_i32_1 = arith.constant 0 : i32
    return %c0_i32, %c0_i32_0 : i32, i32
  }
  func.func @transform_5(%arg0: i32) -> (i32, i32) {
    %c0_i32 = arith.constant 0 : i32
    %c0_i32_0 = arith.constant 0 : i32
    %c0_i32_1 = arith.constant 0 : i32
    return %c0_i32, %c0_i32_0 : i32, i32
  }
  func.func @transform_6(%arg0: i32) -> (i32, i32) {
    %c0_i32 = arith.constant 0 : i32
    %c0_i32_0 = arith.constant 0 : i32
    %c0_i32_1 = arith.constant 0 : i32
    return %c0_i32, %c0_i32_0 : i32, i32
  }
  func.func @transform_7(%arg0: i32) -> (i32, i32) {
    %c0_i32 = arith.constant 0 : i32
    %c0_i32_0 = arith.constant 0 : i32
    return %arg0, %c0_i32 : i32, i32
  }
}

</mosaic_0001>

<llo_original>
// kernel: tpu_custom_call.1
$region0: #{tpu_custom_call.1}
  #allocation0 [shape = 'u32[]', space=smem, size = 0x4, offset = 0x4, fixed_abs, tag = 'smem constant byte address 0x4 - core index']
  #allocation1 [shape = 'u32[144,128]{1,0:T(1,128)}', space=vmem, size = 0x12000, scoped, tag = 'internal scratch']
  %s0 = inlined_call_operand.hbm [shape: f32[8,256], index: 0, kind: input, shape index: {}]
  %s1 = inlined_call_operand.hbm [shape: bf16[256,512], index: 1, kind: input, shape index: {}]
  %s2 = inlined_call_operand.vmem [shape: f32[1,512], index: 2, kind: input, shape index: {}]
  %s3 = inlined_call_operand.hbm [shape: bf16[512,256], index: 3, kind: input, shape index: {}]
  %s4 = inlined_call_operand.vmem [shape: f32[1,256], index: 4, kind: input, shape index: {}]
  %s5 = inlined_call_operand.hbm [shape: bf16[256,128], index: 5, kind: input, shape index: {}]
  %s6 = inlined_call_operand.vmem [shape: f32[1,128], index: 6, kind: input, shape index: {}]
  %s7 = inlined_call_operand.hbm [shape: f32[8,128], index: 7, kind: output, shape index: {}]
  %s8 = sld [smem:[#allocation0]]
  $region54: #{tpu_custom_call.1} parent=0
    _
  %s10 = ssub.s32 1, %s8
  %s11 = scalar_select 0, %s10, %s8
  $region1: #{tpu_custom_call.1} parent=0
    #allocation2 [shape = 'u8[8192]{0}', space=vmem, size = 0x2000, scoped, tag = 'input window, operand 0, single buffered']
    #allocation3 [shape = 's32[1]{0}', space=sflag, size = 0x4, scoped, tag = 'scoped memory for tpu_custom_call.1']
    #allocation4 [shape = 's32[1]{0}', space=sflag, size = 0x4, scoped, tag = 'scoped memory for tpu_custom_call.1']
    #allocation5 [shape = 'u8[262144]{0}', space=vmem, size = 0x40000, scoped, tag = 'input window, operand 1, single buffered']
    #allocation6 [shape = 's32[1]{0}', space=sflag, size = 0x4, scoped, tag = 'scoped memory for tpu_custom_call.1']
    #allocation7 [shape = 'u8[262144]{0}', space=vmem, size = 0x40000, scoped, tag = 'input window, operand 3, single buffered']
    #allocation8 [shape = 'u8[65536]{0}', space=vmem, size = 0x10000, scoped, tag = 'input window, operand 5, single buffered']
    #allocation9 [shape = 's32[1]{0}', space=sflag, size = 0x4, scoped, tag = 'scoped memory for tpu_custom_call.1']
    #allocation10 [shape = 'u8[4096]{0}', space=vmem, size = 0x1000, scoped, tag = 'output window, operand 0, single buffered']
    %12 = vsyncpa [#allocation3], 0
    %13 = vsyncpa [#allocation6], 0
    %14 = vsyncpa [#allocation9], 0
    %15 = vsyncpa [#allocation4], 0
    // Predicated region
    $region2: #{tpu_custom_call.1} parent=1 // pred_check
      _
    $region3: #{tpu_custom_call.1} parent=1 // pred_check_branch
      %17 = sbr.rel (0) target = $region5
    $region4: #{tpu_custom_call.1} parent=1 // pred_region
      %s19 = ssub.s32 256, 256
      %20 = vsyncadd [#allocation3], %s19
      %s22 = sshll.u32 [#allocation2], 4
      %s23 = int_to_ptr.vmem [resolvable:$true] %s22
      %25 = dma.hbm_to_vmem [thread:$0]  %s0, 256, %s23, [#allocation3]
    $region5: #{tpu_custom_call.1} parent=1 // pred_fallthru
      _
    // Predicated region
    $region6: #{tpu_custom_call.1} parent=1 // pred_check
      _
    $region7: #{tpu_custom_call.1} parent=1 // pred_check_branch
      %27 = sbr.rel (0) target = $region9
    $region8: #{tpu_custom_call.1} parent=1 // pred_region
      %s29 = ssub.s32 8192, 8192
      %30 = vsyncadd [#allocation6], %s29
      %s31 = sshll.u32 [#allocation5], 4
      %s32 = int_to_ptr.vmem [resolvable:$true] %s31
      %37 = dma.hbm_to_vmem [thread:$0]  %s1, 8192, %s32, [#allocation6], 256, 256, 16
    $region9: #{tpu_custom_call.1} parent=1 // pred_fallthru
      _
    // Predicated region
    $region10: #{tpu_custom_call.1} parent=1 // pred_check
      _
    $region11: #{tpu_custom_call.1} parent=1 // pred_check_branch
      %39 = sbr.rel (0) target = $region13
    $region12: #{tpu_custom_call.1} parent=1 // pred_region
      _
    $region13: #{tpu_custom_call.1} parent=1 // pred_fallthru
      _
    // Predicated region
    $region14: #{tpu_custom_call.1} parent=1 // pred_check
      _
    $region15: #{tpu_custom_call.1} parent=1 // pred_check_branch
      %41 = sbr.rel (0) target = $region17
    $region16: #{tpu_custom_call.1} parent=1 // pred_region
      %s43 = ssub.s32 8192, 8192
      %44 = vsyncadd [#allocation6], %s43
      %s45 = sshll.u32 [#allocation7], 4
      %s46 = int_to_ptr.vmem [resolvable:$true] %s45
      %51 = dma.hbm_to_vmem [thread:$0]  %s3, 8192, %s46, [#allocation6], 128, 128, 8
    $region17: #{tpu_custom_call.1} parent=1 // pred_fallthru
      _
    // Predicated region
    $region18: #{tpu_custom_call.1} parent=1 // pred_check
      _
    $region19: #{tpu_custom_call.1} parent=1 // pred_check_branch
      %53 = sbr.rel (0) target = $region21
    $region20: #{tpu_custom_call.1} parent=1 // pred_region
      _
    $region21: #{tpu_custom_call.1} parent=1 // pred_fallthru
      _
    // Predicated region
    $region22: #{tpu_custom_call.1} parent=1 // pred_check
      _
    $region23: #{tpu_custom_call.1} parent=1 // pred_check_branch
      %55 = sbr.rel (0) target = $region25
    $region24: #{tpu_custom_call.1} parent=1 // pred_region
      %s57 = ssub.s32 2048, 2048
      %58 = vsyncadd [#allocation9], %s57
      %s59 = sshll.u32 [#allocation8], 4
      %s60 = int_to_ptr.vmem [resolvable:$true] %s59
      %65 = dma.hbm_to_vmem [thread:$0]  %s5, 2048, %s60, [#allocation9], 64, 64, 4
    $region25: #{tpu_custom_call.1} parent=1 // pred_fallthru
      _
    // Predicated region
    $region26: #{tpu_custom_call.1} parent=1 // pred_check
      _
    $region27: #{tpu_custom_call.1} parent=1 // pred_check_branch
      %67 = sbr.rel (0) target = $region29
    $region28: #{tpu_custom_call.1} parent=1 // pred_region
      _
    $region29: #{tpu_custom_call.1} parent=1 // pred_fallthru
      _
    // Predicated region
    $region30: #{tpu_custom_call.1} parent=1 // pred_check
      _
    $region31: #{tpu_custom_call.1} parent=1 // pred_check_branch
      %69 = sbr.rel (0) target = $region33
    $region32: #{tpu_custom_call.1} parent=1 // pred_region
      %70 = dma.done [#allocation3], 256
    $region33: #{tpu_custom_call.1} parent=1 // pred_fallthru
      _
    // Predicated region
    $region34: #{tpu_custom_call.1} parent=1 // pred_check
      _
    $region35: #{tpu_custom_call.1} parent=1 // pred_check_branch
      %72 = sbr.rel (0) target = $region37
    $region36: #{tpu_custom_call.1} parent=1 // pred_region
      %73 = dma.done [#allocation6], 8192
    $region37: #{tpu_custom_call.1} parent=1 // pred_fallthru
      _
    // Predicated region
    $region38: #{tpu_custom_call.1} parent=1 // pred_check
      _
    $region39: #{tpu_custom_call.1} parent=1 // pred_check_branch
      %75 = sbr.rel (0) target = $region41
    $region40: #{tpu_custom_call.1} parent=1 // pred_region
      %76 = dma.done [#allocation6], 8192
    $region41: #{tpu_custom_call.1} parent=1 // pred_fallthru
      _
    // Predicated region
    $region42: #{tpu_custom_call.1} parent=1 // pred_check
      _
    $region43: #{tpu_custom_call.1} parent=1 // pred_check_branch
      %78 = sbr.rel (0) target = $region45
    $region44: #{tpu_custom_call.1} parent=1 // pred_region
      %79 = dma.done [#allocation9], 2048
    $region45: #{tpu_custom_call.1} parent=1 // pred_fallthru
      _
    %v81 = vld [vmem:[#allocation2] sm:$0xff]
    %v82 = vld [vmem:[#allocation2 + $0x8] sm:$0xff]
    %v83 = vpack.c.bf16 %v81, %v81
    %v84 = vpack.c.bf16 %v82, %v82
    %v85 = vld [vmem:[#allocation5] sm:$0xff]
    %v86 = vld [vmem:[#allocation5 + $0x8] sm:$0xff]
    %v87 = vld [vmem:[#allocation5 + $0x10] sm:$0xff]
    %v88 = vld [vmem:[#allocation5 + $0x18] sm:$0xff]
    %v89 = vld [vmem:[#allocation5 + $0x20] sm:$0xff]
    %v90 = vld [vmem:[#allocation5 + $0x28] sm:$0xff]
    %v91 = vld [vmem:[#allocation5 + $0x30] sm:$0xff]
    %v92 = vld [vmem:[#allocation5 + $0x38] sm:$0xff]
    %v93 = vld [vmem:[#allocation5 + $0x40] sm:$0xff]
    %v94 = vld [vmem:[#allocation5 + $0x48] sm:$0xff]
    %v95 = vld [vmem:[#allocation5 + $0x50] sm:$0xff]
    %v96 = vld [vmem:[#allocation5 + $0x58] sm:$0xff]
    %v97 = vld [vmem:[#allocation5 + $0x60] sm:$0xff]
    %v98 = vld [vmem:[#allocation5 + $0x68] sm:$0xff]
    %v99 = vld [vmem:[#allocation5 + $0x70] sm:$0xff]
    %v100 = vld [vmem:[#allocation5 + $0x78] sm:$0xff]
    %v101 = vld [vmem:[#allocation5 + $0x80] sm:$0xff]
    %v102 = vld [vmem:[#allocation5 + $0x88] sm:$0xff]
    %v103 = vld [vmem:[#allocation5 + $0x90] sm:$0xff]
    %v104 = vld [vmem:[#allocation5 + $0x98] sm:$0xff]
    %v105 = vld [vmem:[#allocation5 + $0xa0] sm:$0xff]
    %v106 = vld [vmem:[#allocation5 + $0xa8] sm:$0xff]
    %v107 = vld [vmem:[#allocation5 + $0xb0] sm:$0xff]
    %v108 = vld [vmem:[#allocation5 + $0xb8] sm:$0xff]
    %v109 = vld [vmem:[#allocation5 + $0xc0] sm:$0xff]
    %v110 = vld [vmem:[#allocation5 + $0xc8] sm:$0xff]
    %v111 = vld [vmem:[#allocation5 + $0xd0] sm:$0xff]
    %v112 = vld [vmem:[#allocation5 + $0xd8] sm:$0xff]
    %v113 = vld [vmem:[#allocation5 + $0xe0] sm:$0xff]
    %v114 = vld [vmem:[#allocation5 + $0xe8] sm:$0xff]
    %v115 = vld [vmem:[#allocation5 + $0xf0] sm:$0xff]
    %v116 = vld [vmem:[#allocation5 + $0xf8] sm:$0xff]
    %v117 = vld [vmem:[#allocation5 + $0x100] sm:$0xff]
    %v118 = vld [vmem:[#allocation5 + $0x108] sm:$0xff]
    %v119 = vld [vmem:[#allocation5 + $0x110] sm:$0xff]
    %v120 = vld [vmem:[#allocation5 + $0x118] sm:$0xff]
    %v121 = vld [vmem:[#allocation5 + $0x120] sm:$0xff]
    %v122 = vld [vmem:[#allocation5 + $0x128] sm:$0xff]
    %v123 = vld [vmem:[#allocation5 + $0x130] sm:$0xff]
    %v124 = vld [vmem:[#allocation5 + $0x138] sm:$0xff]
    %v125 = vld [vmem:[#allocation5 + $0x140] sm:$0xff]
    %v126 = vld [vmem:[#allocation5 + $0x148] sm:$0xff]
    %v127 = vld [vmem:[#allocation5 + $0x150] sm:$0xff]
    %v128 = vld [vmem:[#allocation5 + $0x158] sm:$0xff]
    %v129 = vld [vmem:[#allocation5 + $0x160] sm:$0xff]
    %v130 = vld [vmem:[#allocation5 + $0x168] sm:$0xff]
    %v131 = vld [vmem:[#allocation5 + $0x170] sm:$0xff]
    %v132 = vld [vmem:[#allocation5 + $0x178] sm:$0xff]
    %v133 = vld [vmem:[#allocation5 + $0x180] sm:$0xff]
    %v134 = vld [vmem:[#allocation5 + $0x188] sm:$0xff]
    %v135 = vld [vmem:[#allocation5 + $0x190] sm:$0xff]
    %v136 = vld [vmem:[#allocation5 + $0x198] sm:$0xff]
    %v137 = vld [vmem:[#allocation5 + $0x1a0] sm:$0xff]
    %v138 = vld [vmem:[#allocation5 + $0x1a8] sm:$0xff]
    %v139 = vld [vmem:[#allocation5 + $0x1b0] sm:$0xff]
    %v140 = vld [vmem:[#allocation5 + $0x1b8] sm:$0xff]
    %v141 = vld [vmem:[#allocation5 + $0x1c0] sm:$0xff]
    %v142 = vld [vmem:[#allocation5 + $0x1c8] sm:$0xff]
    %v143 = vld [vmem:[#allocation5 + $0x1d0] sm:$0xff]
    %v144 = vld [vmem:[#allocation5 + $0x1d8] sm:$0xff]
    %v145 = vld [vmem:[#allocation5 + $0x1e0] sm:$0xff]
    %v146 = vld [vmem:[#allocation5 + $0x1e8] sm:$0xff]
    %v147 = vld [vmem:[#allocation5 + $0x1f0] sm:$0xff]
    %v148 = vld [vmem:[#allocation5 + $0x1f8] sm:$0xff]
    %v149 = vld [vmem:[%s2] sm:$0xf]
    %v151 = vlaneseq
    %v152 = vshrl.u32 %v151, 7
    %v153 = vsub.s32 0, %v152
    %v154 = vrot.slane %v149, %v153
    %v155 = vlaneseq
    %v156 = vshrl.u32 %v155, 7
    %v157 = vsub.s32 1, %v156
    %v158 = vrot.slane %v149, %v157
    %v159 = vlaneseq
    %v160 = vshrl.u32 %v159, 7
    %v161 = vsub.s32 2, %v160
    %v162 = vrot.slane %v149, %v161
    %v163 = vlaneseq
    %v164 = vshrl.u32 %v163, 7
    %v165 = vsub.s32 3, %v164
    %v166 = vrot.slane %v149, %v165
    %v235 = vunpack.c.l.b16 %v85
    %v236 = vunpack.c.h.b16 %v85
    %v237 = vunpack.c.l.b16 %v86
    %v238 = vunpack.c.h.b16 %v86
    %v239 = vunpack.c.l.b16 %v87
    %v240 = vunpack.c.h.b16 %v87
    %v241 = vunpack.c.l.b16 %v88
    %v242 = vunpack.c.h.b16 %v88
    %v243 = vunpack.c.l.b16 %v89
    %v244 = vunpack.c.h.b16 %v89
    %v245 = vunpack.c.l.b16 %v90
    %v246 = vunpack.c.h.b16 %v90
    %v247 = vunpack.c.l.b16 %v91
    %v248 = vunpack.c.h.b16 %v91
    %v249 = vunpack.c.l.b16 %v92
    %v250 = vunpack.c.h.b16 %v92
    %v251 = vunpack.c.l.b16 %v93
    %v252 = vunpack.c.h.b16 %v93
    %v253 = vunpack.c.l.b16 %v94
    %v254 = vunpack.c.h.b16 %v94
    %v255 = vunpack.c.l.b16 %v95
    %v256 = vunpack.c.h.b16 %v95
    %v257 = vunpack.c.l.b16 %v96
    %v258 = vunpack.c.h.b16 %v96
    %v259 = vunpack.c.l.b16 %v97
    %v260 = vunpack.c.h.b16 %v97
    %v261 = vunpack.c.l.b16 %v98
    %v262 = vunpack.c.h.b16 %v98
    %v263 = vunpack.c.l.b16 %v99
    %v264 = vunpack.c.h.b16 %v99
    %v265 = vunpack.c.l.b16 %v100
    %v266 = vunpack.c.h.b16 %v100
    %v267 = vunpack.c.l.b16 %v101
    %v268 = vunpack.c.h.b16 %v101
    %v269 = vunpack.c.l.b16 %v102
    %v270 = vunpack.c.h.b16 %v102
    %v271 = vunpack.c.l.b16 %v103
    %v272 = vunpack.c.h.b16 %v103
    %v273 = vunpack.c.l.b16 %v104
    %v274 = vunpack.c.h.b16 %v104
    %v275 = vunpack.c.l.b16 %v105
    %v276 = vunpack.c.h.b16 %v105
    %v277 = vunpack.c.l.b16 %v106
    %v278 = vunpack.c.h.b16 %v106
    %v279 = vunpack.c.l.b16 %v107
    %v280 = vunpack.c.h.b16 %v107
    %v281 = vunpack.c.l.b16 %v108
    %v282 = vunpack.c.h.b16 %v108
    %v283 = vunpack.c.l.b16 %v109
    %v284 = vunpack.c.h.b16 %v109
    %v285 = vunpack.c.l.b16 %v110
    %v286 = vunpack.c.h.b16 %v110
    %v287 = vunpack.c.l.b16 %v111
    %v288 = vunpack.c.h.b16 %v111
    %v289 = vunpack.c.l.b16 %v112
    %v290 = vunpack.c.h.b16 %v112
    %v291 = vunpack.c.l.b16 %v113
    %v292 = vunpack.c.h.b16 %v113
    %v293 = vunpack.c.l.b16 %v114
    %v294 = vunpack.c.h.b16 %v114
    %v295 = vunpack.c.l.b16 %v115
    %v296 = vunpack.c.h.b16 %v115
    %v297 = vunpack.c.l.b16 %v116
    %v298 = vunpack.c.h.b16 %v116
    %v299 = vunpack.c.l.b16 %v117
    %v300 = vunpack.c.h.b16 %v117
    %v301 = vunpack.c.l.b16 %v118
    %v302 = vunpack.c.h.b16 %v118
    %v303 = vunpack.c.l.b16 %v119
    %v304 = vunpack.c.h.b16 %v119
    %v305 = vunpack.c.l.b16 %v120
    %v306 = vunpack.c.h.b16 %v120
    %v307 = vunpack.c.l.b16 %v121
    %v308 = vunpack.c.h.b16 %v121
    %v309 = vunpack.c.l.b16 %v122
    %v310 = vunpack.c.h.b16 %v122
    %v311 = vunpack.c.l.b16 %v123
    %v312 = vunpack.c.h.b16 %v123
    %v313 = vunpack.c.l.b16 %v124
    %v314 = vunpack.c.h.b16 %v124
    %v315 = vunpack.c.l.b16 %v125
    %v316 = vunpack.c.h.b16 %v125
    %v317 = vunpack.c.l.b16 %v126
    %v318 = vunpack.c.h.b16 %v126
    %v319 = vunpack.c.l.b16 %v127
    %v320 = vunpack.c.h.b16 %v127
    %v321 = vunpack.c.l.b16 %v128
    %v322 = vunpack.c.h.b16 %v128
    %v323 = vunpack.c.l.b16 %v129
    %v324 = vunpack.c.h.b16 %v129
    %v325 = vunpack.c.l.b16 %v130
    %v326 = vunpack.c.h.b16 %v130
    %v327 = vunpack.c.l.b16 %v131
    %v328 = vunpack.c.h.b16 %v131
    %v329 = vunpack.c.l.b16 %v132
    %v330 = vunpack.c.h.b16 %v132
    %v331 = vunpack.c.l.b16 %v133
    %v332 = vunpack.c.h.b16 %v133
    %v333 = vunpack.c.l.b16 %v134
    %v334 = vunpack.c.h.b16 %v134
    %v335 = vunpack.c.l.b16 %v135
    %v336 = vunpack.c.h.b16 %v135
    %v337 = vunpack.c.l.b16 %v136
    %v338 = vunpack.c.h.b16 %v136
    %v339 = vunpack.c.l.b16 %v137
    %v340 = vunpack.c.h.b16 %v137
    %v341 = vunpack.c.l.b16 %v138
    %v342 = vunpack.c.h.b16 %v138
    %v343 = vunpack.c.l.b16 %v139
    %v344 = vunpack.c.h.b16 %v139
    %v345 = vunpack.c.l.b16 %v140
    %v346 = vunpack.c.h.b16 %v140
    %v347 = vunpack.c.l.b16 %v141
    %v348 = vunpack.c.h.b16 %v141
    %v349 = vunpack.c.l.b16 %v142
    %v350 = vunpack.c.h.b16 %v142
    %v351 = vunpack.c.l.b16 %v143
    %v352 = vunpack.c.h.b16 %v143
    %v353 = vunpack.c.l.b16 %v144
    %v354 = vunpack.c.h.b16 %v144
    %v355 = vunpack.c.l.b16 %v145
    %v356 = vunpack.c.h.b16 %v145
    %v357 = vunpack.c.l.b16 %v146
    %v358 = vunpack.c.h.b16 %v146
    %v359 = vunpack.c.l.b16 %v147
    %v360 = vunpack.c.h.b16 %v147
    %v361 = vunpack.c.l.b16 %v148
    %v362 = vunpack.c.h.b16 %v148
    %v363 = vpack.c.b16 %v239, %v235
    %v364 = vpack.c.b16 %v240, %v236
    %v365 = vpack.c.b16 %v241, %v237
    %v366 = vpack.c.b16 %v242, %v238
    %v367 = vpack.c.b16 %v247, %v243
    %v368 = vpack.c.b16 %v248, %v244
    %v369 = vpack.c.b16 %v249, %v245
    %v370 = vpack.c.b16 %v250, %v246
    %v371 = vpack.c.b16 %v255, %v251
    %v372 = vpack.c.b16 %v256, %v252
    %v373 = vpack.c.b16 %v257, %v253
    %v374 = vpack.c.b16 %v258, %v254
    %v375 = vpack.c.b16 %v263, %v259
    %v376 = vpack.c.b16 %v264, %v260
    %v377 = vpack.c.b16 %v265, %v261
    %v378 = vpack.c.b16 %v266, %v262
    %v379 = vpack.c.b16 %v271, %v267
    %v380 = vpack.c.b16 %v272, %v268
    %v381 = vpack.c.b16 %v273, %v269
    %v382 = vpack.c.b16 %v274, %v270
    %v383 = vpack.c.b16 %v279, %v275
    %v384 = vpack.c.b16 %v280, %v276
    %v385 = vpack.c.b16 %v281, %v277
    %v386 = vpack.c.b16 %v282, %v278
    %v387 = vpack.c.b16 %v287, %v283
    %v388 = vpack.c.b16 %v288, %v284
    %v389 = vpack.c.b16 %v289, %v285
    %v390 = vpack.c.b16 %v290, %v286
    %v391 = vpack.c.b16 %v295, %v291
    %v392 = vpack.c.b16 %v296, %v292
    %v393 = vpack.c.b16 %v297, %v293
    %v394 = vpack.c.b16 %v298, %v294
    %v395 = vpack.c.b16 %v303, %v299
    %v396 = vpack.c.b16 %v304, %v300
    %v397 = vpack.c.b16 %v305, %v301
    %v398 = vpack.c.b16 %v306, %v302
    %v399 = vpack.c.b16 %v311, %v307
    %v400 = vpack.c.b16 %v312, %v308
    %v401 = vpack.c.b16 %v313, %v309
    %v402 = vpack.c.b16 %v314, %v310
    %v403 = vpack.c.b16 %v319, %v315
    %v404 = vpack.c.b16 %v320, %v316
    %v405 = vpack.c.b16 %v321, %v317
    %v406 = vpack.c.b16 %v322, %v318
    %v407 = vpack.c.b16 %v327, %v323
    %v408 = vpack.c.b16 %v328, %v324
    %v409 = vpack.c.b16 %v329, %v325
    %v410 = vpack.c.b16 %v330, %v326
    %v411 = vpack.c.b16 %v335, %v331
    %v412 = vpack.c.b16 %v336, %v332
    %v413 = vpack.c.b16 %v337, %v333
    %v414 = vpack.c.b16 %v338, %v334
    %v415 = vpack.c.b16 %v343, %v339
    %v416 = vpack.c.b16 %v344, %v340
    %v417 = vpack.c.b16 %v345, %v341
    %v418 = vpack.c.b16 %v346, %v342
    %v419 = vpack.c.b16 %v351, %v347
    %v420 = vpack.c.b16 %v352, %v348
    %v421 = vpack.c.b16 %v353, %v349
    %v422 = vpack.c.b16 %v354, %v350
    %v423 = vpack.c.b16 %v359, %v355
    %v424 = vpack.c.b16 %v360, %v356
    %v425 = vpack.c.b16 %v361, %v357
    %v426 = vpack.c.b16 %v362, %v358
    %491 = vmatprep.subr.bf16.mxu0 %v364
    %492 = vmatpush1.bf16.msra.mxu0 %v363
    %493 = vmatprep.subr.bf16.mxu0 %v368
    %494 = vmatpush1.bf16.msra.mxu0 %v367
    %495 = vmatprep.subr.bf16.mxu0 %v372
    %496 = vmatpush1.bf16.msra.mxu0 %v371
    %497 = vmatprep.subr.bf16.mxu0 %v376
    %498 = vmatpush1.bf16.msra.mxu0 %v375
    %499 = vmatprep.subr.bf16.mxu0 %v380
    %500 = vmatpush1.bf16.msra.mxu0 %v379
    %501 = vmatprep.subr.bf16.mxu0 %v384
    %502 = vmatpush1.bf16.msra.mxu0 %v383
    %503 = vmatprep.subr.bf16.mxu0 %v388
    %504 = vmatpush1.bf16.msra.mxu0 %v387
    %505 = vmatprep.subr.bf16.mxu0 %v392
    %506 = vmatpush1.bf16.msra.mxu0 %v391
    %507 = vmatprep.subr.bf16.mxu0 %v396
    %508 = vmatpush1.bf16.msra.mxu0 %v395
    %509 = vmatprep.subr.bf16.mxu0 %v400
    %510 = vmatpush1.bf16.msra.mxu0 %v399
    %511 = vmatprep.subr.bf16.mxu0 %v404
    %512 = vmatpush1.bf16.msra.mxu0 %v403
    %513 = vmatprep.subr.bf16.mxu0 %v408
    %514 = vmatpush1.bf16.msra.mxu0 %v407
    %515 = vmatprep.subr.bf16.mxu0 %v412
    %516 = vmatpush1.bf16.msra.mxu0 %v411
    %517 = vmatprep.subr.bf16.mxu0 %v416
    %518 = vmatpush1.bf16.msra.mxu0 %v415
    %519 = vmatprep.subr.bf16.mxu0 %v420
    %520 = vmatpush1.bf16.msra.mxu0 %v419
    %521 = vmatprep.subr.bf16.mxu0 %v424
    %522 = vmatpush1.bf16.msra.mxu0 %v423
    %523 = vmatprep.mubr.bf16.mxu0 %v84
    %524 = vmatmul.mubr.bf16.gmra.mrb[0].mxu0 %v83
    %v525 = vpop.f32.mrb[0].mxu0
    %v526 = vadd.f32 %v154, %v525
    %v527 = vpop.f32.mrb[0].mxu0
    %v528 = vadd.f32 %v158, %v527
    %v529 = vpop.f32.mrb[0].mxu0
    %v530 = vpop.f32.mrb[0].mxu0
    %531 = vdwg.mxu0
    %532 = vmatprep.subr.bf16.mxu0 %v366
    %533 = vmatpush1.bf16.msra.mxu0 %v365
    %534 = vmatprep.subr.bf16.mxu0 %v370
    %535 = vmatpush1.bf16.msra.mxu0 %v369
    %536 = vmatprep.subr.bf16.mxu0 %v374
    %537 = vmatpush1.bf16.msra.mxu0 %v373
    %538 = vmatprep.subr.bf16.mxu0 %v378
    %539 = vmatpush1.bf16.msra.mxu0 %v377
    %540 = vmatprep.subr.bf16.mxu0 %v382
    %541 = vmatpush1.bf16.msra.mxu0 %v381
    %542 = vmatprep.subr.bf16.mxu0 %v386
    %543 = vmatpush1.bf16.msra.mxu0 %v385
    %544 = vmatprep.subr.bf16.mxu0 %v390
    %545 = vmatpush1.bf16.msra.mxu0 %v389
    %546 = vmatprep.subr.bf16.mxu0 %v394
    %547 = vmatpush1.bf16.msra.mxu0 %v393
    %548 = vmatprep.subr.bf16.mxu0 %v398
    %549 = vmatpush1.bf16.msra.mxu0 %v397
    %550 = vmatprep.subr.bf16.mxu0 %v402
    %551 = vmatpush1.bf16.msra.mxu0 %v401
    %552 = vmatprep.subr.bf16.mxu0 %v406
    %553 = vmatpush1.bf16.msra.mxu0 %v405
    %554 = vmatprep.subr.bf16.mxu0 %v410
    %555 = vmatpush1.bf16.msra.mxu0 %v409
    %556 = vmatprep.subr.bf16.mxu0 %v414
    %557 = vmatpush1.bf16.msra.mxu0 %v413
    %558 = vmatprep.subr.bf16.mxu0 %v418
    %559 = vmatpush1.bf16.msra.mxu0 %v417
    %560 = vmatprep.subr.bf16.mxu0 %v422
    %561 = vmatpush1.bf16.msra.mxu0 %v421
    %562 = vmatprep.subr.bf16.mxu0 %v426
    %563 = vmatpush1.bf16.msra.mxu0 %v425
    %564 = vmatprep.mubr.bf16.mxu0 %v84
    %565 = vmatmul.mubr.bf16.gmra.mrb[0].mxu0 %v83
    %v566 = vpop.f32.mrb[0].mxu0
    %v567 = vadd.f32 %v162, %v566
    %v568 = vpop.f32.mrb[0].mxu0
    %v569 = vadd.f32 %v166, %v568
    %v570 = vpop.f32.mrb[0].mxu0
    %v571 = vpop.f32.mrb[0].mxu0
    %572 = vdwg.mxu0
    %v573 = vmax.f32 %v526, 0.0
    %v574 = vmax.f32 %v528, 0.0
    %v575 = vmax.f32 %v567, 0.0
    %v576 = vmax.f32 %v569, 0.0
    %v577 = vpack.c.bf16 %v573, %v573
    %v578 = vpack.c.bf16 %v574, %v574
    %v579 = vpack.c.bf16 %v575, %v575
    %v580 = vpack.c.bf16 %v576, %v576
    %v581 = vld [vmem:[#allocation7] sm:$0xff]
    %v582 = vld [vmem:[#allocation7 + $0x8] sm:$0xff]
    %v583 = vld [vmem:[#allocation7 + $0x10] sm:$0xff]
    %v584 = vld [vmem:[#allocation7 + $0x18] sm:$0xff]
    %v585 = vld [vmem:[#allocation7 + $0x20] sm:$0xff]
    %v586 = vld [vmem:[#allocation7 + $0x28] sm:$0xff]
    %v587 = vld [vmem:[#allocation7 + $0x30] sm:$0xff]
    %v588 = vld [vmem:[#allocation7 + $0x38] sm:$0xff]
    %v589 = vld [vmem:[#allocation7 + $0x40] sm:$0xff]
    %v590 = vld [vmem:[#allocation7 + $0x48] sm:$0xff]
    %v591 = vld [vmem:[#allocation7 + $0x50] sm:$0xff]
    %v592 = vld [vmem:[#allocation7 + $0x58] sm:$0xff]
    %v593 = vld [vmem:[#allocation7 + $0x60] sm:$0xff]
    %v594 = vld [vmem:[#allocation7 + $0x68] sm:$0xff]
    %v595 = vld [vmem:[#allocation7 + $0x70] sm:$0xff]
    %v596 = vld [vmem:[#allocation7 + $0x78] sm:$0xff]
    %v597 = vld [vmem:[#allocation7 + $0x80] sm:$0xff]
    %v598 = vld [vmem:[#allocation7 + $0x88] sm:$0xff]
    %v599 = vld [vmem:[#allocation7 + $0x90] sm:$0xff]
    %v600 = vld [vmem:[#allocation7 + $0x98] sm:$0xff]
    %v601 = vld [vmem:[#allocation7 + $0xa0] sm:$0xff]
    %v602 = vld [vmem:[#allocation7 + $0xa8] sm:$0xff]
    %v603 = vld [vmem:[#allocation7 + $0xb0] sm:$0xff]
    %v604 = vld [vmem:[#allocation7 + $0xb8] sm:$0xff]
    %v605 = vld [vmem:[#allocation7 + $0xc0] sm:$0xff]
    %v606 = vld [vmem:[#allocation7 + $0xc8] sm:$0xff]
    %v607 = vld [vmem:[#allocation7 + $0xd0] sm:$0xff]
    %v608 = vld [vmem:[#allocation7 + $0xd8] sm:$0xff]
    %v609 = vld [vmem:[#allocation7 + $0xe0] sm:$0xff]
    %v610 = vld [vmem:[#allocation7 + $0xe8] sm:$0xff]
    %v611 = vld [vmem:[#allocation7 + $0xf0] sm:$0xff]
    %v612 = vld [vmem:[#allocation7 + $0xf8] sm:$0xff]
    %v613 = vld [vmem:[#allocation7 + $0x100] sm:$0xff]
    %v614 = vld [vmem:[#allocation7 + $0x108] sm:$0xff]
    %v615 = vld [vmem:[#allocation7 + $0x110] sm:$0xff]
    %v616 = vld [vmem:[#allocation7 + $0x118] sm:$0xff]
    %v617 = vld [vmem:[#allocation7 + $0x120] sm:$0xff]
    %v618 = vld [vmem:[#allocation7 + $0x128] sm:$0xff]
    %v619 = vld [vmem:[#allocation7 + $0x130] sm:$0xff]
    %v620 = vld [vmem:[#allocation7 + $0x138] sm:$0xff]
    %v621 = vld [vmem:[#allocation7 + $0x140] sm:$0xff]
    %v622 = vld [vmem:[#allocation7 + $0x148] sm:$0xff]
    %v623 = vld [vmem:[#allocation7 + $0x150] sm:$0xff]
    %v624 = vld [vmem:[#allocation7 + $0x158] sm:$0xff]
    %v625 = vld [vmem:[#allocation7 + $0x160] sm:$0xff]
    %v626 = vld [vmem:[#allocation7 + $0x168] sm:$0xff]
    %v627 = vld [vmem:[#allocation7 + $0x170] sm:$0xff]
    %v628 = vld [vmem:[#allocation7 + $0x178] sm:$0xff]
    %v629 = vld [vmem:[#allocation7 + $0x180] sm:$0xff]
    %v630 = vld [vmem:[#allocation7 + $0x188] sm:$0xff]
    %v631 = vld [vmem:[#allocation7 + $0x190] sm:$0xff]
    %v632 = vld [vmem:[#allocation7 + $0x198] sm:$0xff]
    %v633 = vld [vmem:[#allocation7 + $0x1a0] sm:$0xff]
    %v634 = vld [vmem:[#allocation7 + $0x1a8] sm:$0xff]
    %v635 = vld [vmem:[#allocation7 + $0x1b0] sm:$0xff]
    %v636 = vld [vmem:[#allocation7 + $0x1b8] sm:$0xff]
    %v637 = vld [vmem:[#allocation7 + $0x1c0] sm:$0xff]
    %v638 = vld [vmem:[#allocation7 + $0x1c8] sm:$0xff]
    %v639 = vld [vmem:[#allocation7 + $0x1d0] sm:$0xff]
    %v640 = vld [vmem:[#allocation7 + $0x1d8] sm:$0xff]
    %v641 = vld [vmem:[#allocation7 + $0x1e0] sm:$0xff]
    %v642 = vld [vmem:[#allocation7 + $0x1e8] sm:$0xff]
    %v643 = vld [vmem:[#allocation7 + $0x1f0] sm:$0xff]
    %v644 = vld [vmem:[#allocation7 + $0x1f8] sm:$0xff]
    %v645 = vld [vmem:[%s4] sm:$0x3]
    %v647 = vlaneseq
    %v648 = vshrl.u32 %v647, 7
    %v649 = vsub.s32 0, %v648
    %v650 = vrot.slane %v645, %v649
    %v651 = vlaneseq
    %v652 = vshrl.u32 %v651, 7
    %v653 = vsub.s32 1, %v652
    %v654 = vrot.slane %v645, %v653
    %v721 = vunpack.c.l.b16 %v581
    %v722 = vunpack.c.h.b16 %v581
    %v723 = vunpack.c.l.b16 %v582
    %v724 = vunpack.c.h.b16 %v582
    %v725 = vunpack.c.l.b16 %v583
    %v726 = vunpack.c.h.b16 %v583
    %v727 = vunpack.c.l.b16 %v584
    %v728 = vunpack.c.h.b16 %v584
    %v729 = vunpack.c.l.b16 %v585
    %v730 = vunpack.c.h.b16 %v585
    %v731 = vunpack.c.l.b16 %v586
    %v732 = vunpack.c.h.b16 %v586
    %v733 = vunpack.c.l.b16 %v587
    %v734 = vunpack.c.h.b16 %v587
    %v735 = vunpack.c.l.b16 %v588
    %v736 = vunpack.c.h.b16 %v588
    %v737 = vunpack.c.l.b16 %v589
    %v738 = vunpack.c.h.b16 %v589
    %v739 = vunpack.c.l.b16 %v590
    %v740 = vunpack.c.h.b16 %v590
    %v741 = vunpack.c.l.b16 %v591
    %v742 = vunpack.c.h.b16 %v591
    %v743 = vunpack.c.l.b16 %v592
    %v744 = vunpack.c.h.b16 %v592
    %v745 = vunpack.c.l.b16 %v593
    %v746 = vunpack.c.h.b16 %v593
    %v747 = vunpack.c.l.b16 %v594
    %v748 = vunpack.c.h.b16 %v594
    %v749 = vunpack.c.l.b16 %v595
    %v750 = vunpack.c.h.b16 %v595
    %v751 = vunpack.c.l.b16 %v596
    %v752 = vunpack.c.h.b16 %v596
    %v753 = vunpack.c.l.b16 %v597
    %v754 = vunpack.c.h.b16 %v597
    %v755 = vunpack.c.l.b16 %v598
    %v756 = vunpack.c.h.b16 %v598
    %v757 = vunpack.c.l.b16 %v599
    %v758 = vunpack.c.h.b16 %v599
    %v759 = vunpack.c.l.b16 %v600
    %v760 = vunpack.c.h.b16 %v600
    %v761 = vunpack.c.l.b16 %v601
    %v762 = vunpack.c.h.b16 %v601
    %v763 = vunpack.c.l.b16 %v602
    %v764 = vunpack.c.h.b16 %v602
    %v765 = vunpack.c.l.b16 %v603
    %v766 = vunpack.c.h.b16 %v603
    %v767 = vunpack.c.l.b16 %v604
    %v768 = vunpack.c.h.b16 %v604
    %v769 = vunpack.c.l.b16 %v605
    %v770 = vunpack.c.h.b16 %v605
    %v771 = vunpack.c.l.b16 %v606
    %v772 = vunpack.c.h.b16 %v606
    %v773 = vunpack.c.l.b16 %v607
    %v774 = vunpack.c.h.b16 %v607
    %v775 = vunpack.c.l.b16 %v608
    %v776 = vunpack.c.h.b16 %v608
    %v777 = vunpack.c.l.b16 %v609
    %v778 = vunpack.c.h.b16 %v609
    %v779 = vunpack.c.l.b16 %v610
    %v780 = vunpack.c.h.b16 %v610
    %v781 = vunpack.c.l.b16 %v611
    %v782 = vunpack.c.h.b16 %v611
    %v783 = vunpack.c.l.b16 %v612
    %v784 = vunpack.c.h.b16 %v612
    %v785 = vunpack.c.l.b16 %v613
    %v786 = vunpack.c.h.b16 %v613
    %v787 = vunpack.c.l.b16 %v614
    %v788 = vunpack.c.h.b16 %v614
    %v789 = vunpack.c.l.b16 %v615
    %v790 = vunpack.c.h.b16 %v615
    %v791 = vunpack.c.l.b16 %v616
    %v792 = vunpack.c.h.b16 %v616
    %v793 = vunpack.c.l.b16 %v617
    %v794 = vunpack.c.h.b16 %v617
    %v795 = vunpack.c.l.b16 %v618
    %v796 = vunpack.c.h.b16 %v618
    %v797 = vunpack.c.l.b16 %v619
    %v798 = vunpack.c.h.b16 %v619
    %v799 = vunpack.c.l.b16 %v620
    %v800 = vunpack.c.h.b16 %v620
    %v801 = vunpack.c.l.b16 %v621
    %v802 = vunpack.c.h.b16 %v621
    %v803 = vunpack.c.l.b16 %v622
    %v804 = vunpack.c.h.b16 %v622
    %v805 = vunpack.c.l.b16 %v623
    %v806 = vunpack.c.h.b16 %v623
    %v807 = vunpack.c.l.b16 %v624
    %v808 = vunpack.c.h.b16 %v624
    %v809 = vunpack.c.l.b16 %v625
    %v810 = vunpack.c.h.b16 %v625
    %v811 = vunpack.c.l.b16 %v626
    %v812 = vunpack.c.h.b16 %v626
    %v813 = vunpack.c.l.b16 %v627
    %v814 = vunpack.c.h.b16 %v627
    %v815 = vunpack.c.l.b16 %v628
    %v816 = vunpack.c.h.b16 %v628
    %v817 = vunpack.c.l.b16 %v629
    %v818 = vunpack.c.h.b16 %v629
    %v819 = vunpack.c.l.b16 %v630
    %v820 = vunpack.c.h.b16 %v630
    %v821 = vunpack.c.l.b16 %v631
    %v822 = vunpack.c.h.b16 %v631
    %v823 = vunpack.c.l.b16 %v632
    %v824 = vunpack.c.h.b16 %v632
    %v825 = vunpack.c.l.b16 %v633
    %v826 = vunpack.c.h.b16 %v633
    %v827 = vunpack.c.l.b16 %v634
    %v828 = vunpack.c.h.b16 %v634
    %v829 = vunpack.c.l.b16 %v635
    %v830 = vunpack.c.h.b16 %v635
    %v831 = vunpack.c.l.b16 %v636
    %v832 = vunpack.c.h.b16 %v636
    %v833 = vunpack.c.l.b16 %v637
    %v834 = vunpack.c.h.b16 %v637
    %v835 = vunpack.c.l.b16 %v638
    %v836 = vunpack.c.h.b16 %v638
    %v837 = vunpack.c.l.b16 %v639
    %v838 = vunpack.c.h.b16 %v639
    %v839 = vunpack.c.l.b16 %v640
    %v840 = vunpack.c.h.b16 %v640
    %v841 = vunpack.c.l.b16 %v641
    %v842 = vunpack.c.h.b16 %v641
    %v843 = vunpack.c.l.b16 %v642
    %v844 = vunpack.c.h.b16 %v642
    %v845 = vunpack.c.l.b16 %v643
    %v846 = vunpack.c.h.b16 %v643
    %v847 = vunpack.c.l.b16 %v644
    %v848 = vunpack.c.h.b16 %v644
    %v849 = vpack.c.b16 %v723, %v721
    %v850 = vpack.c.b16 %v724, %v722
    %v851 = vpack.c.b16 %v727, %v725
    %v852 = vpack.c.b16 %v728, %v726
    %v853 = vpack.c.b16 %v731, %v729
    %v854 = vpack.c.b16 %v732, %v730
    %v855 = vpack.c.b16 %v735, %v733
    %v856 = vpack.c.b16 %v736, %v734
    %v857 = vpack.c.b16 %v739, %v737
    %v858 = vpack.c.b16 %v740, %v738
    %v859 = vpack.c.b16 %v743, %v741
    %v860 = vpack.c.b16 %v744, %v742
    %v861 = vpack.c.b16 %v747, %v745
    %v862 = vpack.c.b16 %v748, %v746
    %v863 = vpack.c.b16 %v751, %v749
    %v864 = vpack.c.b16 %v752, %v750
    %v865 = vpack.c.b16 %v755, %v753
    %v866 = vpack.c.b16 %v756, %v754
    %v867 = vpack.c.b16 %v759, %v757
    %v868 = vpack.c.b16 %v760, %v758
    %v869 = vpack.c.b16 %v763, %v761
    %v870 = vpack.c.b16 %v764, %v762
    %v871 = vpack.c.b16 %v767, %v765
    %v872 = vpack.c.b16 %v768, %v766
    %v873 = vpack.c.b16 %v771, %v769
    %v874 = vpack.c.b16 %v772, %v770
    %v875 = vpack.c.b16 %v775, %v773
    %v876 = vpack.c.b16 %v776, %v774
    %v877 = vpack.c.b16 %v779, %v777
    %v878 = vpack.c.b16 %v780, %v778
    %v879 = vpack.c.b16 %v783, %v781
    %v880 = vpack.c.b16 %v784, %v782
    %v881 = vpack.c.b16 %v787, %v785
    %v882 = vpack.c.b16 %v788, %v786
    %v883 = vpack.c.b16 %v791, %v789
    %v884 = vpack.c.b16 %v792, %v790
    %v885 = vpack.c.b16 %v795, %v793
    %v886 = vpack.c.b16 %v796, %v794
    %v887 = vpack.c.b16 %v799, %v797
    %v888 = vpack.c.b16 %v800, %v798
    %v889 = vpack.c.b16 %v803, %v801
    %v890 = vpack.c.b16 %v804, %v802
    %v891 = vpack.c.b16 %v807, %v805
    %v892 = vpack.c.b16 %v808, %v806
    %v893 = vpack.c.b16 %v811, %v809
    %v894 = vpack.c.b16 %v812, %v810
    %v895 = vpack.c.b16 %v815, %v813
    %v896 = vpack.c.b16 %v816, %v814
    %v897 = vpack.c.b16 %v819, %v817
    %v898 = vpack.c.b16 %v820, %v818
    %v899 = vpack.c.b16 %v823, %v821
    %v900 = vpack.c.b16 %v824, %v822
    %v901 = vpack.c.b16 %v827, %v825
    %v902 = vpack.c.b16 %v828, %v826
    %v903 = vpack.c.b16 %v831, %v829
    %v904 = vpack.c.b16 %v832, %v830
    %v905 = vpack.c.b16 %v835, %v833
    %v906 = vpack.c.b16 %v836, %v834
    %v907 = vpack.c.b16 %v839, %v837
    %v908 = vpack.c.b16 %v840, %v838
    %v909 = vpack.c.b16 %v843, %v841
    %v910 = vpack.c.b16 %v844, %v842
    %v911 = vpack.c.b16 %v847, %v845
    %v912 = vpack.c.b16 %v848, %v846
    %977 = vmatprep.subr.bf16.mxu0 %v850
    %978 = vmatpush1.bf16.msra.mxu0 %v849
    %979 = vmatprep.subr.bf16.mxu0 %v852
    %980 = vmatpush1.bf16.msra.mxu0 %v851
    %981 = vmatprep.subr.bf16.mxu0 %v854
    %982 = vmatpush1.bf16.msra.mxu0 %v853
    %983 = vmatprep.subr.bf16.mxu0 %v856
    %984 = vmatpush1.bf16.msra.mxu0 %v855
    %985 = vmatprep.subr.bf16.mxu0 %v858
    %986 = vmatpush1.bf16.msra.mxu0 %v857
    %987 = vmatprep.subr.bf16.mxu0 %v860
    %988 = vmatpush1.bf16.msra.mxu0 %v859
    %989 = vmatprep.subr.bf16.mxu0 %v862
    %990 = vmatpush1.bf16.msra.mxu0 %v861
    %991 = vmatprep.subr.bf16.mxu0 %v864
    %992 = vmatpush1.bf16.msra.mxu0 %v863
    %993 = vmatprep.subr.bf16.mxu0 %v866
    %994 = vmatpush1.bf16.msra.mxu0 %v865
    %995 = vmatprep.subr.bf16.mxu0 %v868
    %996 = vmatpush1.bf16.msra.mxu0 %v867
    %997 = vmatprep.subr.bf16.mxu0 %v870
    %998 = vmatpush1.bf16.msra.mxu0 %v869
    %999 = vmatprep.subr.bf16.mxu0 %v872
    %1000 = vmatpush1.bf16.msra.mxu0 %v871
    %1001 = vmatprep.subr.bf16.mxu0 %v874
    %1002 = vmatpush1.bf16.msra.mxu0 %v873
    %1003 = vmatprep.subr.bf16.mxu0 %v876
    %1004 = vmatpush1.bf16.msra.mxu0 %v875
    %1005 = vmatprep.subr.bf16.mxu0 %v878
    %1006 = vmatpush1.bf16.msra.mxu0 %v877
    %1007 = vmatprep.subr.bf16.mxu0 %v880
    %1008 = vmatpush1.bf16.msra.mxu0 %v879
    %1009 = vmatprep.mubr.bf16.mxu0 %v578
    %1010 = vmatmul.mubr.bf16.gmra.mrb[0].mxu0 %v577
    %v1011 = vpop.f32.mrb[0].mxu0
    %v1012 = vadd.f32 %v650, %v1011
    %v1013 = vpop.f32.mrb[0].mxu0
    %v1014 = vadd.f32 %v654, %v1013
    %v1015 = vpop.f32.mrb[0].mxu0
    %v1016 = vpop.f32.mrb[0].mxu0
    %1017 = vdwg.mxu0
    %1018 = vmatprep.subr.bf16.mxu0 %v882
    %1019 = vmatpush1.bf16.msra.mxu0 %v881
    %1020 = vmatprep.subr.bf16.mxu0 %v884
    %1021 = vmatpush1.bf16.msra.mxu0 %v883
    %1022 = vmatprep.subr.bf16.mxu0 %v886
    %1023 = vmatpush1.bf16.msra.mxu0 %v885
    %1024 = vmatprep.subr.bf16.mxu0 %v888
    %1025 = vmatpush1.bf16.msra.mxu0 %v887
    %1026 = vmatprep.subr.bf16.mxu0 %v890
    %1027 = vmatpush1.bf16.msra.mxu0 %v889
    %1028 = vmatprep.subr.bf16.mxu0 %v892
    %1029 = vmatpush1.bf16.msra.mxu0 %v891
    %1030 = vmatprep.subr.bf16.mxu0 %v894
    %1031 = vmatpush1.bf16.msra.mxu0 %v893
    %1032 = vmatprep.subr.bf16.mxu0 %v896
    %1033 = vmatpush1.bf16.msra.mxu0 %v895
    %1034 = vmatprep.subr.bf16.mxu0 %v898
    %1035 = vmatpush1.bf16.msra.mxu0 %v897
    %1036 = vmatprep.subr.bf16.mxu0 %v900
    %1037 = vmatpush1.bf16.msra.mxu0 %v899
    %1038 = vmatprep.subr.bf16.mxu0 %v902
    %1039 = vmatpush1.bf16.msra.mxu0 %v901
    %1040 = vmatprep.subr.bf16.mxu0 %v904
    %1041 = vmatpush1.bf16.msra.mxu0 %v903
    %1042 = vmatprep.subr.bf16.mxu0 %v906
    %1043 = vmatpush1.bf16.msra.mxu0 %v905
    %1044 = vmatprep.subr.bf16.mxu0 %v908
    %1045 = vmatpush1.bf16.msra.mxu0 %v907
    %1046 = vmatprep.subr.bf16.mxu0 %v910
    %1047 = vmatpush1.bf16.msra.mxu0 %v909
    %1048 = vmatprep.subr.bf16.mxu0 %v912
    %1049 = vmatpush1.bf16.msra.mxu0 %v911
    %1050 = vmatprep.mubr.bf16.mxu0 %v580
    %1051 = vmatmul.mubr.bf16.gmra.mrb[0].mxu0 %v579
    %v1052 = vpop.f32.mrb[0].mxu0
    %v1053 = vadd.f32 %v1012, %v1052
    %v1054 = vpop.f32.mrb[0].mxu0
    %v1055 = vadd.f32 %v1014, %v1054
    %v1056 = vpop.f32.mrb[0].mxu0
    %v1057 = vpop.f32.mrb[0].mxu0
    %1058 = vdwg.mxu0
    %v1059 = vmax.f32 %v1053, 0.0
    %v1060 = vmax.f32 %v1055, 0.0
    %v1061 = vpack.c.bf16 %v1059, %v1059
    %v1062 = vpack.c.bf16 %v1060, %v1060
    %v1063 = vld [vmem:[#allocation8] sm:$0xf]
    %v1064 = vld [vmem:[#allocation8 + $0x4] sm:$0xf]
    %v1065 = vld [vmem:[#allocation8 + $0x8] sm:$0xf]
    %v1066 = vld [vmem:[#allocation8 + $0xc] sm:$0xf]
    %v1067 = vld [vmem:[#allocation8 + $0x10] sm:$0xf]
    %v1068 = vld [vmem:[#allocation8 + $0x14] sm:$0xf]
    %v1069 = vld [vmem:[#allocation8 + $0x18] sm:$0xf]
    %v1070 = vld [vmem:[#allocation8 + $0x1c] sm:$0xf]
    %v1071 = vld [vmem:[#allocation8 + $0x20] sm:$0xf]
    %v1072 = vld [vmem:[#allocation8 + $0x24] sm:$0xf]
    %v1073 = vld [vmem:[#allocation8 + $0x28] sm:$0xf]
    %v1074 = vld [vmem:[#allocation8 + $0x2c] sm:$0xf]
    %v1075 = vld [vmem:[#allocation8 + $0x30] sm:$0xf]
    %v1076 = vld [vmem:[#allocation8 + $0x34] sm:$0xf]
    %v1077 = vld [vmem:[#allocation8 + $0x38] sm:$0xf]
    %v1078 = vld [vmem:[#allocation8 + $0x3c] sm:$0xf]
    %v1079 = vld [vmem:[#allocation8 + $0x40] sm:$0xf]
    %v1080 = vld [vmem:[#allocation8 + $0x44] sm:$0xf]
    %v1081 = vld [vmem:[#allocation8 + $0x48] sm:$0xf]
    %v1082 = vld [vmem:[#allocation8 + $0x4c] sm:$0xf]
    %v1083 = vld [vmem:[#allocation8 + $0x50] sm:$0xf]
    %v1084 = vld [vmem:[#allocation8 + $0x54] sm:$0xf]
    %v1085 = vld [vmem:[#allocation8 + $0x58] sm:$0xf]
    %v1086 = vld [vmem:[#allocation8 + $0x5c] sm:$0xf]
    %v1087 = vld [vmem:[#allocation8 + $0x60] sm:$0xf]
    %v1088 = vld [vmem:[#allocation8 + $0x64] sm:$0xf]
    %v1089 = vld [vmem:[#allocation8 + $0x68] sm:$0xf]
    %v1090 = vld [vmem:[#allocation8 + $0x6c] sm:$0xf]
    %v1091 = vld [vmem:[#allocation8 + $0x70] sm:$0xf]
    %v1092 = vld [vmem:[#allocation8 + $0x74] sm:$0xf]
    %v1093 = vld [vmem:[#allocation8 + $0x78] sm:$0xf]
    %v1094 = vld [vmem:[#allocation8 + $0x7c] sm:$0xf]
    %v1095 = vld [vmem:[%s6] sm:$0x1]
    %v1097 = vlaneseq
    %v1098 = vshrl.u32 %v1097, 7
    %v1099 = vsub.s32 0, %v1098
    %v1100 = vrot.slane %v1095, %v1099
    %v1134 = vunpack.c.l.b16 %v1063
    %v1135 = vunpack.c.l.b16 %v1064
    %v1136 = vunpack.c.l.b16 %v1065
    %v1137 = vunpack.c.l.b16 %v1066
    %v1138 = vunpack.c.l.b16 %v1067
    %v1139 = vunpack.c.l.b16 %v1068
    %v1140 = vunpack.c.l.b16 %v1069
    %v1141 = vunpack.c.l.b16 %v1070
    %v1142 = vunpack.c.l.b16 %v1071
    %v1143 = vunpack.c.l.b16 %v1072
    %v1144 = vunpack.c.l.b16 %v1073
    %v1145 = vunpack.c.l.b16 %v1074
    %v1146 = vunpack.c.l.b16 %v1075
    %v1147 = vunpack.c.l.b16 %v1076
    %v1148 = vunpack.c.l.b16 %v1077
    %v1149 = vunpack.c.l.b16 %v1078
    %v1150 = vunpack.c.l.b16 %v1079
    %v1151 = vunpack.c.l.b16 %v1080
    %v1152 = vunpack.c.l.b16 %v1081
    %v1153 = vunpack.c.l.b16 %v1082
    %v1154 = vunpack.c.l.b16 %v1083
    %v1155 = vunpack.c.l.b16 %v1084
    %v1156 = vunpack.c.l.b16 %v1085
    %v1157 = vunpack.c.l.b16 %v1086
    %v1158 = vunpack.c.l.b16 %v1087
    %v1159 = vunpack.c.l.b16 %v1088
    %v1160 = vunpack.c.l.b16 %v1089
    %v1161 = vunpack.c.l.b16 %v1090
    %v1162 = vunpack.c.l.b16 %v1091
    %v1163 = vunpack.c.l.b16 %v1092
    %v1164 = vunpack.c.l.b16 %v1093
    %v1165 = vunpack.c.l.b16 %v1094
    %v1166 = vpack.c.b16 %v1135, %v1134
    %v1167 = vpack.c.b16 %v1137, %v1136
    %v1168 = vpack.c.b16 %v1139, %v1138
    %v1169 = vpack.c.b16 %v1141, %v1140
    %v1170 = vpack.c.b16 %v1143, %v1142
    %v1171 = vpack.c.b16 %v1145, %v1144
    %v1172 = vpack.c.b16 %v1147, %v1146
    %v1173 = vpack.c.b16 %v1149, %v1148
    %v1174 = vpack.c.b16 %v1151, %v1150
    %v1175 = vpack.c.b16 %v1153, %v1152
    %v1176 = vpack.c.b16 %v1155, %v1154
    %v1177 = vpack.c.b16 %v1157, %v1156
    %v1178 = vpack.c.b16 %v1159, %v1158
    %v1179 = vpack.c.b16 %v1161, %v1160
    %v1180 = vpack.c.b16 %v1163, %v1162
    %v1181 = vpack.c.b16 %v1165, %v1164
    %1198 = vmatprep.subr.bf16.mxu0 0
    %1199 = vmatpush1.bf16.msra.mxu0 %v1166
    %1200 = vmatprep.subr.bf16.mxu0 0
    %1201 = vmatpush1.bf16.msra.mxu0 %v1167
    %1202 = vmatprep.subr.bf16.mxu0 0
    %1203 = vmatpush1.bf16.msra.mxu0 %v1168
    %1204 = vmatprep.subr.bf16.mxu0 0
    %1205 = vmatpush1.bf16.msra.mxu0 %v1169
    %1206 = vmatprep.subr.bf16.mxu0 0
    %1207 = vmatpush1.bf16.msra.mxu0 %v1170
    %1208 = vmatprep.subr.bf16.mxu0 0
    %1209 = vmatpush1.bf16.msra.mxu0 %v1171
    %1210 = vmatprep.subr.bf16.mxu0 0
    %1211 = vmatpush1.bf16.msra.mxu0 %v1172
    %1212 = vmatprep.subr.bf16.mxu0 0
    %1213 = vmatpush1.bf16.msra.mxu0 %v1173
    %1214 = vmatprep.subr.bf16.mxu0 0
    %1215 = vmatpush1.bf16.msra.mxu0 %v1174
    %1216 = vmatprep.subr.bf16.mxu0 0
    %1217 = vmatpush1.bf16.msra.mxu0 %v1175
    %1218 = vmatprep.subr.bf16.mxu0 0
    %1219 = vmatpush1.bf16.msra.mxu0 %v1176
    %1220 = vmatprep.subr.bf16.mxu0 0
    %1221 = vmatpush1.bf16.msra.mxu0 %v1177
    %1222 = vmatprep.subr.bf16.mxu0 0
    %1223 = vmatpush1.bf16.msra.mxu0 %v1178
    %1224 = vmatprep.subr.bf16.mxu0 0
    %1225 = vmatpush1.bf16.msra.mxu0 %v1179
    %1226 = vmatprep.subr.bf16.mxu0 0
    %1227 = vmatpush1.bf16.msra.mxu0 %v1180
    %1228 = vmatprep.subr.bf16.mxu0 0
    %1229 = vmatpush1.bf16.msra.mxu0 %v1181
    %1230 = vmatprep.mubr.bf16.mxu0 %v1062
    %1231 = vmatmul.mubr.bf16.gmra.mrb[0].mxu0 %v1061
    %v1232 = vpop.f32.mrb[0].mxu0
    %v1233 = vadd.f32 %v1100, %v1232
    %v1234 = vpop.f32.mrb[0].mxu0
    %v1235 = vpop.f32.mrb[0].mxu0
    %v1236 = vpop.f32.mrb[0].mxu0
    %1237 = vdwg.mxu0
    %1238 = vst [vmem:[#allocation10] sm:$0xff] %v1233
    // Predicated region
    $region46: #{tpu_custom_call.1} parent=1 // pred_check
      _
    $region47: #{tpu_custom_call.1} parent=1 // pred_check_branch
      %1240 = sbr.rel (0) target = $region49
    $region48: #{tpu_custom_call.1} parent=1 // pred_region
      %s1242 = ssub.s32 128, 128
      %1243 = vsyncadd [#allocation4], %s1242
      %s1245 = sshll.u32 [#allocation10], 4
      %s1246 = int_to_ptr.vmem [resolvable:$true] %s1245
      %1248 = dma.vmem_to_hbm [thread:$0]  %s1246, 128, %s7, [#allocation4]
    $region49: #{tpu_custom_call.1} parent=1 // pred_fallthru
      _
    // Predicated region
    $region50: #{tpu_custom_call.1} parent=1 // pred_check
      _
    $region51: #{tpu_custom_call.1} parent=1 // pred_check_branch
      %1250 = sbr.rel (0) target = $region53
    $region52: #{tpu_custom_call.1} parent=1 // pred_region
      %1251 = dma.done [#allocation4], 128
    $region53: #{tpu_custom_call.1} parent=1 // pred_fallthru
      _
    %1252 = vsyncpa [#allocation3], 1
    %1253 = vsyncpa [#allocation6], 1
    %1254 = vsyncpa [#allocation9], 1
    %1255 = vsyncpa [#allocation4], 1

</llo_original>
